<compile_context>
chip_gen: v6e
topology: v6e:2x2x1
jax: 0.10.0
libtpu: 0.0.40
codegen_flags: <defaults>
</compile_context>

<pallas_src>
import jax
import jax.numpy as jnp
from jax.experimental import pallas as pl
from jax.experimental.pallas import tpu as pltpu


# ----------------------------------------------------------------------------
# Fused kernel: attribute-attention pooling + ft_compose_cls head
# ----------------------------------------------------------------------------
def scen_fused_kernel(fs_ref, ae_ref, w1_ref, b1_ref, w2_ref, b2_ref,
                      cls_ref, fglob_ref):
    # fs_ref : (TB, R, dim_f)      bf16 region features (lane-dense dim_f)
    # ae_ref : (num_att, dim_f)    bf16 hoisted att_emb = V @ W_1
    # w1_ref : (dim_f, hidden)     bf16 fc1 weight,  b1_ref: (1, hidden) f32
    # w2_ref : (hidden, n_pad)     bf16 fc2 weight (lane-padded), b2_ref: (1, n_pad) f32
    # cls_ref: (TB, n_pad)         f32 logits (padded)
    # fglob_ref: (TB, dim_f)       f32 pooled global attribute feature
    TB, R, D = fs_ref.shape

    fs = fs_ref[...]                                        # (TB, R, D) bf16
    ae = ae_ref[...]                                        # (A,  D)    bf16

    # Attention scores: S[b, r, a] = <Fs[b, r, :], att_emb[a, :]>
    # Single 2-D MXU matmul over all TB batch rows (contract the lane dim).
    s = jax.lax.dot_general(
        fs.reshape(TB * R, D), ae,
        dimension_numbers=(((1,), (1,)), ((), ())),
        preferred_element_type=jnp.float32)                 # (TB*R, A)
    s = s.reshape(TB, R, ae.shape[0])                       # (TB, R, A)

    # Softmax over regions (axis=1), f32 everywhere.
    m = jnp.max(s, axis=1, keepdims=True)                   # (TB, 1, A)
    p = jnp.exp(s - m)
    inv = pl.reciprocal(jnp.sum(p, axis=1, keepdims=True), approx=True)
    a = p * inv                                             # (TB, R, A)

    # compose_type == "mean": average attention over attributes FIRST (exact),
    # then one weighted region sum replaces the [num_att, dim_f] PV matmul.
    a_mean = jnp.mean(a, axis=-1, keepdims=True)            # (TB, R, 1)
    f_global = jnp.sum(a_mean * fs.astype(jnp.float32), axis=1)   # (TB, D) f32

    fglob_ref[...] = f_global

    # Fused ft_compose_cls: Linear -> LeakyReLU(0.01) -> Linear (lane-padded out)
    h = jnp.dot(f_global.astype(w1_ref.dtype), w1_ref[...],
                preferred_element_type=jnp.float32) + b1_ref[...]
    h = jnp.where(h >= 0.0, h, 0.01 * h)
    cls_ref[...] = jnp.dot(h.astype(w2_ref.dtype), w2_ref[...],
                           preferred_element_type=jnp.float32) + b2_ref[...]


# ----------------------------------------------------------------------------
# SCEN forward wrapper
# ----------------------------------------------------------------------------
def scen_forward(input_res_nchw, params, *, compute_dtype=jnp.bfloat16):
    B, C, H, W = input_res_nchw.shape
    dim_f = C
    R = H * W

    # Lane-dense layout: [B, R, dim_f]; bf16 halves HBM traffic / VMEM.
    fs = jnp.transpose(input_res_nchw.reshape(B, C, R), (0, 2, 1))
    fs = fs.astype(compute_dtype)

    # Hoisted, batch-independent attribute projection (done once in XLA).
    att_emb = jnp.dot(params["w2v_att"], params["W_1"]).astype(compute_dtype)
    num_att = att_emb.shape[0]

    hidden = params["fc1_w"].shape[1]
    nclass = params["fc2_w"].shape[1]

    # Pad classifier lane dim to a multiple of 128 -> unmasked stores.
    n_pad = ((nclass + 127) // 128) * 128
    w1 = params["fc1_w"].astype(compute_dtype)
    b1 = params["fc1_b"].astype(jnp.float32).reshape(1, hidden)
    w2 = jnp.zeros((hidden, n_pad), compute_dtype).at[:, :nclass].set(
        params["fc2_w"].astype(compute_dtype))
    b2 = jnp.zeros((1, n_pad), jnp.float32).at[:, :nclass].set(
        params["fc2_b"].astype(jnp.float32).reshape(1, nclass))

    # Batch tiling: whole batch in one step when small, otherwise TB=8
    # (sublane-aligned) with zero padding.
    TB = B if B <= 8 else 8
    B_pad = pl.cdiv(B, TB) * TB
    if B_pad != B:
        fs = jnp.pad(fs, ((0, B_pad - B), (0, 0), (0, 0)))

    cls_out, f_global = pl.pallas_call(
        scen_fused_kernel,
        out_shape=(jax.ShapeDtypeStruct((B_pad, n_pad), jnp.float32),
                   jax.ShapeDtypeStruct((B_pad, dim_f), jnp.float32)),
        grid_spec=pltpu.PrefetchScalarGridSpec(
            num_scalar_prefetch=0,
            grid=(B_pad // TB,),
            in_specs=[
                pl.BlockSpec((TB, R, dim_f), lambda b: (b, 0, 0)),
                pl.BlockSpec((num_att, dim_f), lambda b: (0, 0)),
                pl.BlockSpec((dim_f, hidden), lambda b: (0, 0)),
                pl.BlockSpec((1, hidden), lambda b: (0, 0)),
                pl.BlockSpec((hidden, n_pad), lambda b: (0, 0)),
                pl.BlockSpec((1, n_pad), lambda b: (0, 0)),
            ],
            out_specs=[
                pl.BlockSpec((TB, n_pad), lambda b: (b, 0)),
                pl.BlockSpec((TB, dim_f), lambda b: (b, 0)),
            ],
        ),
        compiler_params=pltpu.CompilerParams(
            dimension_semantics=("parallel",),
            vmem_limit_bytes=32 * 1024 * 1024),
    )(fs, att_emb, w1, b1, w2, b2)

    cls_out = cls_out[:B, :nclass]
    f_global = f_global[:B, :]
    # out_package['S_pp'] = cls_out  (as in SCEN.forward)
    return {"S_pp": cls_out, "f_global": f_global}


# ----------------------------------------------------------------------------
if __name__ == "__main__":
    # Small, module-consistent shapes.
    B = 2            # batch
    resSize = 32     # config.resSize (dim_f)
    H = W = 4        # spatial -> R = 16 regions
    dim_v = 16       # config.atten_dim_v
    num_att = 8      # rows of w2v_att
    hidden = 1024    # fixed by the module: nn.Linear(resSize, 1024)
    nclass_all = 16  # config.nclass_all

    key = jax.random.PRNGKey(0)
    k_in, k_v, k_w1, k_f1w, k_f1b, k_f2w, k_f2b = jax.random.split(key, 7)

    input_res = jax.random.normal(k_in, (B, resSize, H, W), dtype=jnp.float32)

    params = {
        # frozen DAZLE attention parameters (deterministic synthetic init)
        "w2v_att": 0.1 * jax.random.normal(k_v, (num_att, dim_v), jnp.float32),
        "W_1":     0.1 * jax.random.normal(k_w1, (dim_v, resSize), jnp.float32),
        # ft_compose_cls parameters
        "fc1_w": 0.05 * jax.random.normal(k_f1w, (resSize, hidden), jnp.float32),
        "fc1_b": 0.05 * jax.random.normal(k_f1b, (1, hidden), jnp.float32),
        "fc2_w": 0.05 * jax.random.normal(k_f2w, (hidden, nclass_all), jnp.float32),
        "fc2_b": 0.05 * jax.random.normal(k_f2b, (1, nclass_all), jnp.float32),
    }

    out = scen_forward(input_res, params)
    jax.block_until_ready(out["S_pp"])
    jax.block_until_ready(out["f_global"])

    assert out["S_pp"].shape == (B, nclass_all)
    assert out["f_global"].shape == (B, resSize)
    print("KERNEL_OK")
</pallas_src>

<mosaic_0001>
module attributes {stable_mosaic.version = 11 : i64} {
  func.func @scen_fused_kernel(%arg0: i32, %arg1: memref<2x16x32xbf16, #tpu.memory_space<vmem>>, %arg2: memref<8x32xbf16, #tpu.memory_space<vmem>>, %arg3: memref<32x1024xbf16, #tpu.memory_space<vmem>>, %arg4: memref<1x1024xf32, #tpu.memory_space<vmem>>, %arg5: memref<1024x128xbf16, #tpu.memory_space<vmem>>, %arg6: memref<1x128xf32, #tpu.memory_space<vmem>>, %arg7: memref<2x128xf32, #tpu.memory_space<vmem>>, %arg8: memref<2x32xf32, #tpu.memory_space<vmem>>) attributes {dimension_semantics = [#tpu.dimension_semantics<parallel>], iteration_bounds = array<i64: 1>, scalar_prefetch = 0 : i64, scratch_operands = 0 : i64, tpu.core_type = #tpu.core_type<tc>, window_params = [{transform_indices = @transform_0, window_bounds = array<i64: 2, 16, 32>}, {pipeline_mode = #tpu.pipeline_mode<synchronous>, transform_indices = @transform_1, window_bounds = array<i64: 8, 32>}, {pipeline_mode = #tpu.pipeline_mode<synchronous>, transform_indices = @transform_2, window_bounds = array<i64: 32, 1024>}, {pipeline_mode = #tpu.pipeline_mode<synchronous>, transform_indices = @transform_3, window_bounds = array<i64: 1, 1024>}, {pipeline_mode = #tpu.pipeline_mode<synchronous>, transform_indices = @transform_4, window_bounds = array<i64: 1024, 128>}, {pipeline_mode = #tpu.pipeline_mode<synchronous>, transform_indices = @transform_5, window_bounds = array<i64: 1, 128>}, {transform_indices = @transform_6, window_bounds = array<i64: 2, 128>}, {transform_indices = @transform_7, window_bounds = array<i64: 2, 32>}]} {
    %c0 = arith.constant 0 : index
    %c0_0 = arith.constant 0 : index
    %c0_1 = arith.constant 0 : index
    %0 = vector.load %arg1[%c0, %c0_0, %c0_1] : memref<2x16x32xbf16, #tpu.memory_space<vmem>>, vector<2x16x32xbf16>
    %c0_2 = arith.constant 0 : index
    %c0_3 = arith.constant 0 : index
    %1 = vector.load %arg2[%c0_2, %c0_3] : memref<8x32xbf16, #tpu.memory_space<vmem>>, vector<8x32xbf16>
    %2 = vector.shape_cast %0 : vector<2x16x32xbf16> to vector<32x32xbf16>
    %cst = arith.constant dense<0.000000e+00> : vector<32x8xf32>
    %3 = tpu.matmul %2, %1, %cst {dimension_numbers = #tpu.dot_dimension_numbers<[1], [1], [0], [0], [0, 0, 1, 0], [], []>} : vector<32x32xbf16>, vector<8x32xbf16>, vector<32x8xf32> -> vector<32x8xf32>
    %4 = vector.shape_cast %3 : vector<32x8xf32> to vector<2x16x8xf32>
    %cst_4 = arith.constant dense<0xFF800000> : vector<2x8xf32>
    %5 = vector.multi_reduction <maximumf>, %4, %cst_4 [1] : vector<2x16x8xf32> to vector<2x8xf32>
    %6 = vector.shape_cast %5 : vector<2x8xf32> to vector<2x1x8xf32>
    %7 = vector.broadcast %6 : vector<2x1x8xf32> to vector<2x16x8xf32>
    %8 = arith.subf %4, %7 : vector<2x16x8xf32>
    %9 = math.exp %8 : vector<2x16x8xf32>
    %cst_5 = arith.constant dense<0.000000e+00> : vector<2x8xf32>
    %10 = vector.multi_reduction <add>, %9, %cst_5 [1] : vector<2x16x8xf32> to vector<2x8xf32>
    %11 = vector.shape_cast %10 : vector<2x8xf32> to vector<2x1x8xf32>
    %12 = tpu.reciprocal %11 {approx = true} : vector<2x1x8xf32> -> vector<2x1x8xf32>
    %13 = vector.broadcast %12 : vector<2x1x8xf32> to vector<2x16x8xf32>
    %14 = arith.mulf %9, %13 : vector<2x16x8xf32>
    %cst_6 = arith.constant dense<0.000000e+00> : vector<2x16xf32>
    %15 = vector.multi_reduction <add>, %14, %cst_6 [2] : vector<2x16x8xf32> to vector<2x16xf32>
    %16 = vector.shape_cast %15 : vector<2x16xf32> to vector<2x16x1xf32>
    %cst_7 = arith.constant 8.000000e+00 : f32
    %17 = vector.broadcast %cst_7 : f32 to vector<2x16x1xf32>
    %18 = arith.divf %16, %17 : vector<2x16x1xf32>
    %19 = arith.extf %0 : vector<2x16x32xbf16> to vector<2x16x32xf32>
    %20 = vector.broadcast %18 : vector<2x16x1xf32> to vector<2x16x32xf32>
    %21 = arith.mulf %20, %19 : vector<2x16x32xf32>
    %cst_8 = arith.constant dense<0.000000e+00> : vector<2x32xf32>
    %22 = vector.multi_reduction <add>, %21, %cst_8 [1] : vector<2x16x32xf32> to vector<2x32xf32>
    %c0_9 = arith.constant 0 : index
    %c0_10 = arith.constant 0 : index
    %23 = vector.load %arg8[%c0_9, %c0_10] : memref<2x32xf32, #tpu.memory_space<vmem>>, vector<2x32xf32>
    tpu.vector_store %arg8[%c0_9, %c0_10], %22 {strides = array<i32>} : memref<2x32xf32, #tpu.memory_space<vmem>>, vector<2x32xf32>,
    %24 = arith.truncf %22 : vector<2x32xf32> to vector<2x32xbf16>
    %c0_11 = arith.constant 0 : index
    %c0_12 = arith.constant 0 : index
    %25 = vector.load %arg3[%c0_11, %c0_12] : memref<32x1024xbf16, #tpu.memory_space<vmem>>, vector<32x1024xbf16>
    %cst_13 = arith.constant dense<0.000000e+00> : vector<2x1024xf32>
    %26 = tpu.matmul %24, %25, %cst_13 {dimension_numbers = #tpu.dot_dimension_numbers<[1], [0], [0], [1], [0, 0, 1, 1], [], []>} : vector<2x32xbf16>, vector<32x1024xbf16>, vector<2x1024xf32> -> vector<2x1024xf32>
    %c0_14 = arith.constant 0 : index
    %c0_15 = arith.constant 0 : index
    %27 = vector.load %arg4[%c0_14, %c0_15] : memref<1x1024xf32, #tpu.memory_space<vmem>>, vector<1x1024xf32>
    %28 = vector.broadcast %27 : vector<1x1024xf32> to vector<2x1024xf32>
    %29 = arith.addf %26, %28 : vector<2x1024xf32>
    %cst_16 = arith.constant 0.000000e+00 : f32
    %30 = vector.broadcast %cst_16 : f32 to vector<2x1024xf32>
    %31 = arith.cmpf oge, %29, %30 : vector<2x1024xf32>
    %cst_17 = arith.constant 0.00999999977 : f32
    %32 = vector.broadcast %cst_17 : f32 to vector<2x1024xf32>
    %33 = arith.mulf %32, %29 : vector<2x1024xf32>
    %34 = arith.select %31, %29, %33 : vector<2x1024xi1>, vector<2x1024xf32>
    %35 = arith.truncf %34 : vector<2x1024xf32> to vector<2x1024xbf16>
    %c0_18 = arith.constant 0 : index
    %c0_19 = arith.constant 0 : index
    %36 = vector.load %arg5[%c0_18, %c0_19] : memref<1024x128xbf16, #tpu.memory_space<vmem>>, vector<1024x128xbf16>
    %cst_20 = arith.constant dense<0.000000e+00> : vector<2x128xf32>
    %37 = tpu.matmul %35, %36, %cst_20 {dimension_numbers = #tpu.dot_dimension_numbers<[1], [0], [0], [1], [0, 0, 1, 1], [], []>} : vector<2x1024xbf16>, vector<1024x128xbf16>, vector<2x128xf32> -> vector<2x128xf32>
    %c0_21 = arith.constant 0 : index
    %c0_22 = arith.constant 0 : index
    %38 = vector.load %arg6[%c0_21, %c0_22] : memref<1x128xf32, #tpu.memory_space<vmem>>, vector<1x128xf32>
    %39 = vector.broadcast %38 : vector<1x128xf32> to vector<2x128xf32>
    %40 = arith.addf %37, %39 : vector<2x128xf32>
    %c0_23 = arith.constant 0 : index
    %c0_24 = arith.constant 0 : index
    %41 = vector.load %arg7[%c0_23, %c0_24] : memref<2x128xf32, #tpu.memory_space<vmem>>, vector<2x128xf32>
    tpu.vector_store %arg7[%c0_23, %c0_24], %40 {strides = array<i32>} : memref<2x128xf32, #tpu.memory_space<vmem>>, vector<2x128xf32>,
    return
  }
  func.func @transform_0(%arg0: i32) -> (i32, i32, i32) {
    %c0_i32 = arith.constant 0 : i32
    %c0_i32_0 = arith.constant 0 : i32
    %c0_i32_1 = arith.constant 0 : i32
    return %arg0, %c0_i32, %c0_i32_0 : i32, i32, i32
  }
  func.func @transform_1(%arg0: i32) -> (i32, i32) {
    %c0_i32 = arith.constant 0 : i32
    %c0_i32_0 = arith.constant 0 : i32
    %c0_i32_1 = arith.constant 0 : i32
    return %c0_i32, %c0_i32_0 : i32, i32
  }
  func.func @transform_2(%arg0: i32) -> (i32, i32) {
    %c0_i32 = arith.constant 0 : i32
    %c0_i32_0 = arith.constant 0 : i32
    %c0_i32_1 = arith.constant 0 : i32
    return %c0_i32, %c0_i32_0 : i32, i32
  }
  func.func @transform_3(%arg0: i32) -> (i32, i32) {
    %c0_i32 = arith.constant 0 : i32
    %c0_i32_0 = arith.constant 0 : i32
    %c0_i32_1 = arith.constant 0 : i32
    return %c0_i32, %c0_i32_0 : i32, i32
  }
  func.func @transform_4(%arg0: i32) -> (i32, i32) {
    %c0_i32 = arith.constant 0 : i32
    %c0_i32_0 = arith.constant 0 : i32
    %c0_i32_1 = arith.constant 0 : i32
    return %c0_i32, %c0_i32_0 : i32, i32
  }
  func.func @transform_5(%arg0: i32) -> (i32, i32) {
    %c0_i32 = arith.constant 0 : i32
    %c0_i32_0 = arith.constant 0 : i32
    %c0_i32_1 = arith.constant 0 : i32
    return %c0_i32, %c0_i32_0 : i32, i32
  }
  func.func @transform_6(%arg0: i32) -> (i32, i32) {
    %c0_i32 = arith.constant 0 : i32
    %c0_i32_0 = arith.constant 0 : i32
    return %arg0, %c0_i32 : i32, i32
  }
  func.func @transform_7(%arg0: i32) -> (i32, i32) {
    %c0_i32 = arith.constant 0 : i32
    %c0_i32_0 = arith.constant 0 : i32
    return %arg0, %c0_i32 : i32, i32
  }
}

</mosaic_0001>

<llo_original>
// kernel: tpu_custom_call.1
$region0: #{tpu_custom_call.1}
  #allocation0 [shape = 'u32[]', space=smem, size = 0x4, offset = 0x4, fixed_abs, tag = 'smem constant byte address 0x4 - core index']
  #allocation1 [shape = 'u32[144,128]{1,0:T(1,128)}', space=vmem, size = 0x12000, scoped, tag = 'internal scratch']
  %s0 = inlined_call_operand.hbm [shape: bf16[2,16,32], index: 0, kind: input, shape index: {}]
  %s1 = inlined_call_operand.hbm [shape: bf16[8,32], index: 1, kind: input, shape index: {}]
  %s2 = inlined_call_operand.hbm [shape: bf16[32,1024], index: 2, kind: input, shape index: {}]
  %s3 = inlined_call_operand.hbm [shape: f32[1,1024], index: 3, kind: input, shape index: {}]
  %s4 = inlined_call_operand.hbm [shape: bf16[1024,128], index: 4, kind: input, shape index: {}]
  %s5 = inlined_call_operand.vmem [shape: f32[1,128], index: 5, kind: input, shape index: {}]
  %s6 = inlined_call_operand.hbm [shape: f32[2,128], index: 6, kind: output, shape index: {0}]
  %s7 = inlined_call_operand.hbm [shape: f32[2,32], index: 7, kind: output, shape index: {1}]
  %8 = xla_tuple %s6, %s7
  %s9 = sld [smem:[#allocation0]]
  $region62: #{tpu_custom_call.1} parent=0
    _
  %s11 = ssub.s32 1, %s9
  %s12 = scalar_select 0, %s11, %s9
  $region1: #{tpu_custom_call.1} parent=0
    #allocation2 [shape = 'u8[8192]{0}', space=vmem, size = 0x2000, scoped, tag = 'input window, operand 0, single buffered']
    #allocation3 [shape = 's32[1]{0}', space=sflag, size = 0x4, scoped, tag = 'scoped memory for tpu_custom_call.1']
    #allocation4 [shape = 's32[1]{0}', space=sflag, size = 0x4, scoped, tag = 'scoped memory for tpu_custom_call.1']
    #allocation5 [shape = 'u8[2048]{0}', space=vmem, size = 0x800, scoped, tag = 'input window, operand 1, single buffered']
    #allocation6 [shape = 's32[1]{0}', space=sflag, size = 0x4, scoped, tag = 'scoped memory for tpu_custom_call.1']
    #allocation7 [shape = 'u8[65536]{0}', space=vmem, size = 0x10000, scoped, tag = 'input window, operand 2, single buffered']
    #allocation8 [shape = 'u8[4096]{0}', space=vmem, size = 0x1000, scoped, tag = 'input window, operand 3, single buffered']
    #allocation9 [shape = 's32[1]{0}', space=sflag, size = 0x4, scoped, tag = 'scoped memory for tpu_custom_call.1']
    #allocation10 [shape = 'u8[262144]{0}', space=vmem, size = 0x40000, scoped, tag = 'input window, operand 4, single buffered']
    #allocation11 [shape = 'u8[1024]{0}', space=vmem, size = 0x400, scoped, tag = 'output window, operand 0, single buffered']
    #allocation12 [shape = 'u8[1024]{0}', space=vmem, size = 0x400, scoped, tag = 'output window, operand 1, single buffered']
    #allocation13 [shape = 's32[1]{0}', space=sflag, size = 0x4, scoped, tag = 'scoped memory for tpu_custom_call.1']
    %13 = vsyncpa [#allocation3], 0
    %14 = vsyncpa [#allocation6], 0
    %15 = vsyncpa [#allocation9], 0
    %16 = vsyncpa [#allocation4], 0
    %17 = vsyncpa [#allocation13], 0
    // Predicated region
    $region2: #{tpu_custom_call.1} parent=1 // pred_check
      _
    $region3: #{tpu_custom_call.1} parent=1 // pred_check_branch
      %19 = sbr.rel (0) target = $region5
    $region4: #{tpu_custom_call.1} parent=1 // pred_region
      %s21 = ssub.s32 256, 256
      %22 = vsyncadd [#allocation3], %s21
      %s23 = sshll.u32 [#allocation2], 4
      %s24 = int_to_ptr.vmem [resolvable:$true] %s23
      %29 = dma.hbm_to_vmem [thread:$0]  %s0, 256, %s24, [#allocation3], 64, 64, 4
    $region5: #{tpu_custom_call.1} parent=1 // pred_fallthru
      _
    // Predicated region
    $region6: #{tpu_custom_call.1} parent=1 // pred_check
      _
    $region7: #{tpu_custom_call.1} parent=1 // pred_check_branch
      %31 = sbr.rel (0) target = $region9
    $region8: #{tpu_custom_call.1} parent=1 // pred_region
      %s33 = ssub.s32 64, 64
      %34 = vsyncadd [#allocation6], %s33
      %s36 = sshll.u32 [#allocation5], 4
      %s37 = int_to_ptr.vmem [resolvable:$true] %s36
      %39 = dma.hbm_to_vmem [thread:$0]  %s1, 64, %s37, [#allocation6]
    $region9: #{tpu_custom_call.1} parent=1 // pred_fallthru
      _
    // Predicated region
    $region10: #{tpu_custom_call.1} parent=1 // pred_check
      _
    $region11: #{tpu_custom_call.1} parent=1 // pred_check_branch
      %41 = sbr.rel (0) target = $region13
    $region12: #{tpu_custom_call.1} parent=1 // pred_region
      %s43 = ssub.s32 2048, 2048
      %44 = vsyncadd [#allocation6], %s43
      %s45 = sshll.u32 [#allocation7], 4
      %s46 = int_to_ptr.vmem [resolvable:$true] %s45
      %51 = dma.hbm_to_vmem [thread:$0]  %s2, 2048, %s46, [#allocation6], 512, 512, 32
    $region13: #{tpu_custom_call.1} parent=1 // pred_fallthru
      _
    // Predicated region
    $region14: #{tpu_custom_call.1} parent=1 // pred_check
      _
    $region15: #{tpu_custom_call.1} parent=1 // pred_check_branch
      %53 = sbr.rel (0) target = $region17
    $region16: #{tpu_custom_call.1} parent=1 // pred_region
      %s55 = ssub.s32 128, 128
      %56 = vsyncadd [#allocation9], %s55
      %s58 = sshll.u32 [#allocation8], 4
      %s59 = int_to_ptr.vmem [resolvable:$true] %s58
      %61 = dma.hbm_to_vmem [thread:$0]  %s3, 128, %s59, [#allocation9]
    $region17: #{tpu_custom_call.1} parent=1 // pred_fallthru
      _
    // Predicated region
    $region18: #{tpu_custom_call.1} parent=1 // pred_check
      _
    $region19: #{tpu_custom_call.1} parent=1 // pred_check_branch
      %63 = sbr.rel (0) target = $region21
    $region20: #{tpu_custom_call.1} parent=1 // pred_region
      %s65 = ssub.s32 8192, 8192
      %66 = vsyncadd [#allocation9], %s65
      %s67 = sshll.u32 [#allocation10], 4
      %s68 = int_to_ptr.vmem [resolvable:$true] %s67
      %73 = dma.hbm_to_vmem [thread:$0]  %s4, 8192, %s68, [#allocation9], 64, 64, 4
    $region21: #{tpu_custom_call.1} parent=1 // pred_fallthru
      _
    // Predicated region
    $region22: #{tpu_custom_call.1} parent=1 // pred_check
      _
    $region23: #{tpu_custom_call.1} parent=1 // pred_check_branch
      %75 = sbr.rel (0) target = $region25
    $region24: #{tpu_custom_call.1} parent=1 // pred_region
      _
    $region25: #{tpu_custom_call.1} parent=1 // pred_fallthru
      _
    // Predicated region
    $region26: #{tpu_custom_call.1} parent=1 // pred_check
      _
    $region27: #{tpu_custom_call.1} parent=1 // pred_check_branch
      %77 = sbr.rel (0) target = $region29
    $region28: #{tpu_custom_call.1} parent=1 // pred_region
      %78 = dma.done [#allocation3], 256
    $region29: #{tpu_custom_call.1} parent=1 // pred_fallthru
      _
    // Predicated region
    $region30: #{tpu_custom_call.1} parent=1 // pred_check
      _
    $region31: #{tpu_custom_call.1} parent=1 // pred_check_branch
      %80 = sbr.rel (0) target = $region33
    $region32: #{tpu_custom_call.1} parent=1 // pred_region
      %81 = dma.done [#allocation6], 64
    $region33: #{tpu_custom_call.1} parent=1 // pred_fallthru
      _
    // Predicated region
    $region34: #{tpu_custom_call.1} parent=1 // pred_check
      _
    $region35: #{tpu_custom_call.1} parent=1 // pred_check_branch
      %83 = sbr.rel (0) target = $region37
    $region36: #{tpu_custom_call.1} parent=1 // pred_region
      %84 = dma.done [#allocation6], 2048
    $region37: #{tpu_custom_call.1} parent=1 // pred_fallthru
      _
    // Predicated region
    $region38: #{tpu_custom_call.1} parent=1 // pred_check
      _
    $region39: #{tpu_custom_call.1} parent=1 // pred_check_branch
      %86 = sbr.rel (0) target = $region41
    $region40: #{tpu_custom_call.1} parent=1 // pred_region
      %87 = dma.done [#allocation9], 128
    $region41: #{tpu_custom_call.1} parent=1 // pred_fallthru
      _
    // Predicated region
    $region42: #{tpu_custom_call.1} parent=1 // pred_check
      _
    $region43: #{tpu_custom_call.1} parent=1 // pred_check_branch
      %89 = sbr.rel (0) target = $region45
    $region44: #{tpu_custom_call.1} parent=1 // pred_region
      %90 = dma.done [#allocation9], 8192
    $region45: #{tpu_custom_call.1} parent=1 // pred_fallthru
      _
    %v92 = vld [vmem:[#allocation2] sm:$0xf]
    %v93 = vld [vmem:[#allocation2 + $0x4] sm:$0xf]
    %v94 = vld [vmem:[#allocation2 + $0x8] sm:$0xf]
    %v95 = vld [vmem:[#allocation2 + $0xc] sm:$0xf]
    %v96 = vld [vmem:[#allocation5] sm:$0xf]
    %v101 = vunpack.c.l.b16 %v92
    %v102 = vunpack.c.l.b16 %v93
    %v103 = vunpack.c.l.b16 %v94
    %v104 = vunpack.c.l.b16 %v95
    %v105 = vpack.c.b16 %v102, %v101
    %v106 = vpack.c.b16 %v104, %v103
    %vm107 = vcmask 261120
    %v109 = vsel %vm107, %v105, 0
    %v112 = vsel %vm107, %v106, 0
    %v115 = vsel %vm107, %v96, 0
    %117 = vmatprep.subr.bf16.mxu0 0
    %118 = vmatpush1.bf16.xpose.msra.mxu0 0
    %119 = vmatprep.subr.bf16.mxu0 0
    %120 = vmatpush1.bf16.xpose.msra.mxu0 0
    %121 = vmatprep.subr.bf16.mxu0 0
    %122 = vmatpush1.bf16.xpose.msra.mxu0 0
    %123 = vmatprep.subr.bf16.mxu0 0
    %124 = vmatpush1.bf16.xpose.msra.mxu0 0
    %125 = vmatprep.subr.bf16.mxu0 0
    %126 = vmatpush1.bf16.xpose.msra.mxu0 0
    %127 = vmatprep.subr.bf16.mxu0 0
    %128 = vmatpush1.bf16.xpose.msra.mxu0 0
    %129 = vmatprep.subr.bf16.mxu0 0
    %130 = vmatpush1.bf16.xpose.msra.mxu0 0
    %131 = vmatprep.subr.bf16.mxu0 0
    %132 = vmatpush1.bf16.xpose.msra.mxu0 %v115
    %133 = vmatprep.subr.bf16.mxu0 0
    %134 = vmatpush2.bf16.xpose.msra.mxu0 0
    %135 = vmatprep.subr.bf16.mxu0 0
    %136 = vmatpush2.bf16.xpose.msra.mxu0 0
    %137 = vmatprep.subr.bf16.mxu0 0
    %138 = vmatpush2.bf16.xpose.msra.mxu0 0
    %139 = vmatprep.subr.bf16.mxu0 0
    %140 = vmatpush2.bf16.xpose.msra.mxu0 0
    %141 = vmatprep.subr.bf16.mxu0 0
    %142 = vmatpush2.bf16.xpose.msra.mxu0 0
    %143 = vmatprep.subr.bf16.mxu0 0
    %144 = vmatpush2.bf16.xpose.msra.mxu0 0
    %145 = vmatprep.subr.bf16.mxu0 0
    %146 = vmatpush2.bf16.xpose.msra.mxu0 0
    %147 = vmatprep.subr.bf16.mxu0 0
    %148 = vmatpush2.bf16.xpose.msra.mxu0 0
    %149 = vmatprep.mubr.bf16.mxu0 0
    %150 = vmatmul.mubr.bf16.gmra.mxu0 %v109
    %v151 = vpop.f32.mrf.mxu0
    %v152 = vadd.f32 0.0, %v151
    %v153 = vpop.f32.mrf.mxu0
    %v154 = vpop.f32.mrf.mxu0
    %v155 = vadd.f32 0.0, %v154
    %v156 = vpop.f32.mrf.mxu0
    %157 = vmatprep.mubr.bf16.mxu0 0
    %158 = vmatmul.mubr.bf16.gmra.mxu0 %v112
    %v159 = vpop.f32.mrf.mxu0
    %v160 = vadd.f32 0.0, %v159
    %v161 = vpop.f32.mrf.mxu0
    %v162 = vpop.f32.mrf.mxu0
    %v163 = vadd.f32 0.0, %v162
    %v164 = vpop.f32.mrf.mxu0
    %165 = vdwg.mxu0
    %vm166 = vcmask 64512
    %v167 = vsel %vm166, %v152, -inf
    %v168 = vsel %vm166, %v155, -inf
    %v169 = vmax.f32 %v167, %v168
    %v170 = vrot.slane %v169, 4
    %v171 = vmax.f32 %v169, %v170
    %v172 = vrot.slane %v171, 2
    %v173 = vmax.f32 %v171, %v172
    %v174 = vrot.slane %v173, 1
    %v175 = vmax.f32 %v173, %v174
    %v176 = vsel %vm166, %v160, -inf
    %v177 = vsel %vm166, %v163, -inf
    %v178 = vmax.f32 %v176, %v177
    %v179 = vrot.slane %v178, 4
    %v180 = vmax.f32 %v178, %v179
    %v181 = vrot.slane %v180, 2
    %v182 = vmax.f32 %v180, %v181
    %v183 = vrot.slane %v182, 1
    %v184 = vmax.f32 %v182, %v183
    %v185 = vsub.f32 %v152, %v175
    %v186 = vsub.f32 %v155, %v175
    %v187 = vsub.f32 %v160, %v184
    %v188 = vsub.f32 %v163, %v184
    %v189 = vmul.f32 %v185, 1.442695
    %v190 = vpow.pop %v189
    %v191 = vmul.f32 %v186, 1.442695
    %v192 = vpow.pop %v191
    %v193 = vmul.f32 %v187, 1.442695
    %v194 = vpow.pop %v193
    %v195 = vmul.f32 %v188, 1.442695
    %v196 = vpow.pop %v195
    %v197 = vsel %vm166, %v190, 0.0
    %v198 = vsel %vm166, %v192, 0.0
    %v199 = vadd.f32 %v197, %v198
    %v200 = vrot.slane %v199, 4
    %v201 = vadd.f32 %v199, %v200
    %v202 = vrot.slane %v201, 2
    %v203 = vadd.f32 %v201, %v202
    %v204 = vrot.slane %v203, 1
    %v205 = vadd.f32 %v203, %v204
    %v206 = vsel %vm166, %v194, 0.0
    %v207 = vsel %vm166, %v196, 0.0
    %v208 = vadd.f32 %v206, %v207
    %v209 = vrot.slane %v208, 4
    %v210 = vadd.f32 %v208, %v209
    %v211 = vrot.slane %v210, 2
    %v212 = vadd.f32 %v210, %v211
    %v213 = vrot.slane %v212, 1
    %v214 = vadd.f32 %v212, %v213
    %v215 = vrcp.pop %v205
    %v216 = vrcp.pop %v214
    %v217 = vmul.f32 %v190, %v215
    %v218 = vmul.f32 %v192, %v215
    %v219 = vmul.f32 %v194, %v216
    %v220 = vmul.f32 %v196, %v216
    %v221 = vsel %vm166, %v217, 0.0
    %222 = vadd.xlane.f32.xlu0 %v221
    %v223 = vpop.xlane.xlu0 %222
    %v224 = vsel %vm166, %v218, 0.0
    %225 = vadd.xlane.f32.xlu0 %v224
    %v226 = vpop.xlane.xlu0 %225
    %v227 = vsel %vm166, %v219, 0.0
    %228 = vadd.xlane.f32.xlu0 %v227
    %v229 = vpop.xlane.xlu0 %228
    %v230 = vsel %vm166, %v220, 0.0
    %231 = vadd.xlane.f32.xlu0 %v230
    %v232 = vpop.xlane.xlu0 %231
    %v233 = vrcp.pop 8.0
    %v234 = vmul.f32 %v223, %v233
    %v235 = vmul.f32 %v226, %v233
    %v236 = vmul.f32 %v229, %v233
    %v237 = vmul.f32 %v232, %v233
    %v238 = vunpack.c.l.bf16 %v92
    %v239 = vunpack.c.l.bf16 %v93
    %v240 = vunpack.c.l.bf16 %v94
    %v241 = vunpack.c.l.bf16 %v95
    %v242 = vmul.f32 %v234, %v238
    %v243 = vmul.f32 %v235, %v239
    %v244 = vmul.f32 %v236, %v240
    %v245 = vmul.f32 %v237, %v241
    %v246 = vsel %vm107, %v242, 0.0
    %v247 = vsel %vm107, %v243, 0.0
    %v248 = vadd.f32 %v246, %v247
    %v249 = vrot.slane %v248, 4
    %v250 = vadd.f32 %v248, %v249
    %v251 = vrot.slane %v250, 2
    %v252 = vadd.f32 %v250, %v251
    %v253 = vrot.slane %v252, 1
    %v254 = vadd.f32 %v252, %v253
    %v255 = vsel %vm107, %v244, 0.0
    %v256 = vsel %vm107, %v245, 0.0
    %v257 = vadd.f32 %v255, %v256
    %v258 = vrot.slane %v257, 4
    %v259 = vadd.f32 %v257, %v258
    %v260 = vrot.slane %v259, 2
    %v261 = vadd.f32 %v259, %v260
    %v262 = vrot.slane %v261, 1
    %v263 = vadd.f32 %v261, %v262
    %vm266 = vcmask 1041409
    %v267 = vsel %vm266, %v263, %v254
    %vm269 = vcmask 254976
    %270 = vst.msk [vmem:[#allocation12] sm:$0x3] %vm269, %v267
    %v271 = vpack.c.bf16 %v254, %v254
    %v272 = vpack.c.bf16 %v263, %v263
    %v273 = vld [vmem:[#allocation7] sm:$0xff]
    %v274 = vld [vmem:[#allocation7 + $0x8] sm:$0xff]
    %v275 = vld [vmem:[#allocation7 + $0x10] sm:$0xff]
    %v276 = vld [vmem:[#allocation7 + $0x18] sm:$0xff]
    %v277 = vld [vmem:[#allocation7 + $0x20] sm:$0xff]
    %v278 = vld [vmem:[#allocation7 + $0x28] sm:$0xff]
    %v279 = vld [vmem:[#allocation7 + $0x30] sm:$0xff]
    %v280 = vld [vmem:[#allocation7 + $0x38] sm:$0xff]
    %v281 = vld [vmem:[#allocation7 + $0x40] sm:$0xff]
    %v282 = vld [vmem:[#allocation7 + $0x48] sm:$0xff]
    %v283 = vld [vmem:[#allocation7 + $0x50] sm:$0xff]
    %v284 = vld [vmem:[#allocation7 + $0x58] sm:$0xff]
    %v285 = vld [vmem:[#allocation7 + $0x60] sm:$0xff]
    %v286 = vld [vmem:[#allocation7 + $0x68] sm:$0xff]
    %v287 = vld [vmem:[#allocation7 + $0x70] sm:$0xff]
    %v288 = vld [vmem:[#allocation7 + $0x78] sm:$0xff]
    %v289 = vld [vmem:[#allocation8] sm:$0xff]
    %v291 = vlaneseq
    %v292 = vshrl.u32 %v291, 7
    %v293 = vsub.s32 0, %v292
    %v294 = vrot.slane %v289, %v293
    %v295 = vlaneseq
    %v296 = vshrl.u32 %v295, 7
    %v297 = vsub.s32 1, %v296
    %v298 = vrot.slane %v289, %v297
    %v299 = vlaneseq
    %v300 = vshrl.u32 %v299, 7
    %v301 = vsub.s32 2, %v300
    %v302 = vrot.slane %v289, %v301
    %v303 = vlaneseq
    %v304 = vshrl.u32 %v303, 7
    %v305 = vsub.s32 3, %v304
    %v306 = vrot.slane %v289, %v305
    %v307 = vlaneseq
    %v308 = vshrl.u32 %v307, 7
    %v309 = vsub.s32 4, %v308
    %v310 = vrot.slane %v289, %v309
    %v311 = vlaneseq
    %v312 = vshrl.u32 %v311, 7
    %v313 = vsub.s32 5, %v312
    %v314 = vrot.slane %v289, %v313
    %v315 = vlaneseq
    %v316 = vshrl.u32 %v315, 7
    %v317 = vsub.s32 6, %v316
    %v318 = vrot.slane %v289, %v317
    %v319 = vlaneseq
    %v320 = vshrl.u32 %v319, 7
    %v321 = vsub.s32 7, %v320
    %v322 = vrot.slane %v289, %v321
    %v333 = vunpack.c.l.b16 %v271
    %v334 = vunpack.c.l.b16 %v272
    %v335 = vsel %vm266, %v334, %v333
    %v336 = vpack.c.b16 %v335, %v335
    %v353 = vunpack.c.l.b16 %v273
    %v354 = vunpack.c.h.b16 %v273
    %v355 = vunpack.c.l.b16 %v274
    %v356 = vunpack.c.h.b16 %v274
    %v357 = vunpack.c.l.b16 %v275
    %v358 = vunpack.c.h.b16 %v275
    %v359 = vunpack.c.l.b16 %v276
    %v360 = vunpack.c.h.b16 %v276
    %v361 = vunpack.c.l.b16 %v277
    %v362 = vunpack.c.h.b16 %v277
    %v363 = vunpack.c.l.b16 %v278
    %v364 = vunpack.c.h.b16 %v278
    %v365 = vunpack.c.l.b16 %v279
    %v366 = vunpack.c.h.b16 %v279
    %v367 = vunpack.c.l.b16 %v280
    %v368 = vunpack.c.h.b16 %v280
    %v369 = vunpack.c.l.b16 %v281
    %v370 = vunpack.c.h.b16 %v281
    %v371 = vunpack.c.l.b16 %v282
    %v372 = vunpack.c.h.b16 %v282
    %v373 = vunpack.c.l.b16 %v283
    %v374 = vunpack.c.h.b16 %v283
    %v375 = vunpack.c.l.b16 %v284
    %v376 = vunpack.c.h.b16 %v284
    %v377 = vunpack.c.l.b16 %v285
    %v378 = vunpack.c.h.b16 %v285
    %v379 = vunpack.c.l.b16 %v286
    %v380 = vunpack.c.h.b16 %v286
    %v381 = vunpack.c.l.b16 %v287
    %v382 = vunpack.c.h.b16 %v287
    %v383 = vunpack.c.l.b16 %v288
    %v384 = vunpack.c.h.b16 %v288
    %v385 = vpack.c.b16 %v361, %v353
    %v386 = vpack.c.b16 %v362, %v354
    %v387 = vpack.c.b16 %v363, %v355
    %v388 = vpack.c.b16 %v364, %v356
    %v389 = vpack.c.b16 %v365, %v357
    %v390 = vpack.c.b16 %v366, %v358
    %v391 = vpack.c.b16 %v367, %v359
    %v392 = vpack.c.b16 %v368, %v360
    %v393 = vpack.c.b16 %v377, %v369
    %v394 = vpack.c.b16 %v378, %v370
    %v395 = vpack.c.b16 %v379, %v371
    %v396 = vpack.c.b16 %v380, %v372
    %v397 = vpack.c.b16 %v381, %v373
    %v398 = vpack.c.b16 %v382, %v374
    %v399 = vpack.c.b16 %v383, %v375
    %v400 = vpack.c.b16 %v384, %v376
    %v418 = vsel %vm107, %v336, 0
    %420 = vmatprep.subr.bf16.mxu0 0
    %421 = vmatpush1.bf16.msra.mxu0 0
    %422 = vmatprep.subr.bf16.mxu0 0
    %423 = vmatpush1.bf16.msra.mxu0 0
    %424 = vmatprep.subr.bf16.mxu0 0
    %425 = vmatpush1.bf16.msra.mxu0 0
    %426 = vmatprep.subr.bf16.mxu0 0
    %427 = vmatpush1.bf16.msra.mxu0 0
    %428 = vmatprep.subr.bf16.mxu0 0
    %429 = vmatpush1.bf16.msra.mxu0 0
    %430 = vmatprep.subr.bf16.mxu0 0
    %431 = vmatpush1.bf16.msra.mxu0 0
    %432 = vmatprep.subr.bf16.mxu0 %v394
    %433 = vmatpush1.bf16.msra.mxu0 %v393
    %434 = vmatprep.subr.bf16.mxu0 %v386
    %435 = vmatpush1.bf16.msra.mxu0 %v385
    %436 = vmatprep.subr.bf16.mxu0 0
    %437 = vmatpush2.bf16.msra.mxu0 0
    %438 = vmatprep.subr.bf16.mxu0 0
    %439 = vmatpush2.bf16.msra.mxu0 0
    %440 = vmatprep.subr.bf16.mxu0 0
    %441 = vmatpush2.bf16.msra.mxu0 0
    %442 = vmatprep.subr.bf16.mxu0 0
    %443 = vmatpush2.bf16.msra.mxu0 0
    %444 = vmatprep.subr.bf16.mxu0 0
    %445 = vmatpush2.bf16.msra.mxu0 0
    %446 = vmatprep.subr.bf16.mxu0 0
    %447 = vmatpush2.bf16.msra.mxu0 0
    %448 = vmatprep.subr.bf16.mxu0 0
    %449 = vmatpush2.bf16.msra.mxu0 0
    %450 = vmatprep.subr.bf16.mxu0 0
    %451 = vmatpush2.bf16.msra.mxu0 0
    %452 = vmatprep.mubr.bf16.mxu0 0
    %453 = vmatmul.mubr.bf16.gmra.mxu0 %v418
    %v454 = vpop.f32.mrf.mxu0
    %v455 = vadd.f32 %v294, %v454
    %v456 = vpop.f32.mrf.mxu0
    %v457 = vadd.f32 %v298, %v456
    %v458 = vpop.f32.mrf.mxu0
    %v459 = vpop.f32.mrf.mxu0
    %460 = vdwg.mxu0
    %461 = vmatprep.subr.bf16.mxu0 0
    %462 = vmatpush1.bf16.msra.mxu0 0
    %463 = vmatprep.subr.bf16.mxu0 0
    %464 = vmatpush1.bf16.msra.mxu0 0
    %465 = vmatprep.subr.bf16.mxu0 0
    %466 = vmatpush1.bf16.msra.mxu0 0
    %467 = vmatprep.subr.bf16.mxu0 0
    %468 = vmatpush1.bf16.msra.mxu0 0
    %469 = vmatprep.subr.bf16.mxu0 0
    %470 = vmatpush1.bf16.msra.mxu0 0
    %471 = vmatprep.subr.bf16.mxu0 0
    %472 = vmatpush1.bf16.msra.mxu0 0
    %473 = vmatprep.subr.bf16.mxu0 %v396
    %474 = vmatpush1.bf16.msra.mxu0 %v395
    %475 = vmatprep.subr.bf16.mxu0 %v388
    %476 = vmatpush1.bf16.msra.mxu0 %v387
    %477 = vmatprep.subr.bf16.mxu0 0
    %478 = vmatpush2.bf16.msra.mxu0 0
    %479 = vmatprep.subr.bf16.mxu0 0
    %480 = vmatpush2.bf16.msra.mxu0 0
    %481 = vmatprep.subr.bf16.mxu0 0
    %482 = vmatpush2.bf16.msra.mxu0 0
    %483 = vmatprep.subr.bf16.mxu0 0
    %484 = vmatpush2.bf16.msra.mxu0 0
    %485 = vmatprep.subr.bf16.mxu0 0
    %486 = vmatpush2.bf16.msra.mxu0 0
    %487 = vmatprep.subr.bf16.mxu0 0
    %488 = vmatpush2.bf16.msra.mxu0 0
    %489 = vmatprep.subr.bf16.mxu0 0
    %490 = vmatpush2.bf16.msra.mxu0 0
    %491 = vmatprep.subr.bf16.mxu0 0
    %492 = vmatpush2.bf16.msra.mxu0 0
    %493 = vmatprep.mubr.bf16.mxu0 0
    %494 = vmatmul.mubr.bf16.gmra.mxu0 %v418
    %v495 = vpop.f32.mrf.mxu0
    %v496 = vadd.f32 %v302, %v495
    %v497 = vpop.f32.mrf.mxu0
    %v498 = vadd.f32 %v306, %v497
    %v499 = vpop.f32.mrf.mxu0
    %v500 = vpop.f32.mrf.mxu0
    %501 = vdwg.mxu0
    %502 = vmatprep.subr.bf16.mxu0 0
    %503 = vmatpush1.bf16.msra.mxu0 0
    %504 = vmatprep.subr.bf16.mxu0 0
    %505 = vmatpush1.bf16.msra.mxu0 0
    %506 = vmatprep.subr.bf16.mxu0 0
    %507 = vmatpush1.bf16.msra.mxu0 0
    %508 = vmatprep.subr.bf16.mxu0 0
    %509 = vmatpush1.bf16.msra.mxu0 0
    %510 = vmatprep.subr.bf16.mxu0 0
    %511 = vmatpush1.bf16.msra.mxu0 0
    %512 = vmatprep.subr.bf16.mxu0 0
    %513 = vmatpush1.bf16.msra.mxu0 0
    %514 = vmatprep.subr.bf16.mxu0 %v398
    %515 = vmatpush1.bf16.msra.mxu0 %v397
    %516 = vmatprep.subr.bf16.mxu0 %v390
    %517 = vmatpush1.bf16.msra.mxu0 %v389
    %518 = vmatprep.subr.bf16.mxu0 0
    %519 = vmatpush2.bf16.msra.mxu0 0
    %520 = vmatprep.subr.bf16.mxu0 0
    %521 = vmatpush2.bf16.msra.mxu0 0
    %522 = vmatprep.subr.bf16.mxu0 0
    %523 = vmatpush2.bf16.msra.mxu0 0
    %524 = vmatprep.subr.bf16.mxu0 0
    %525 = vmatpush2.bf16.msra.mxu0 0
    %526 = vmatprep.subr.bf16.mxu0 0
    %527 = vmatpush2.bf16.msra.mxu0 0
    %528 = vmatprep.subr.bf16.mxu0 0
    %529 = vmatpush2.bf16.msra.mxu0 0
    %530 = vmatprep.subr.bf16.mxu0 0
    %531 = vmatpush2.bf16.msra.mxu0 0
    %532 = vmatprep.subr.bf16.mxu0 0
    %533 = vmatpush2.bf16.msra.mxu0 0
    %534 = vmatprep.mubr.bf16.mxu0 0
    %535 = vmatmul.mubr.bf16.gmra.mxu0 %v418
    %v536 = vpop.f32.mrf.mxu0
    %v537 = vadd.f32 %v310, %v536
    %v538 = vpop.f32.mrf.mxu0
    %v539 = vadd.f32 %v314, %v538
    %v540 = vpop.f32.mrf.mxu0
    %v541 = vpop.f32.mrf.mxu0
    %542 = vdwg.mxu0
    %543 = vmatprep.subr.bf16.mxu0 0
    %544 = vmatpush1.bf16.msra.mxu0 0
    %545 = vmatprep.subr.bf16.mxu0 0
    %546 = vmatpush1.bf16.msra.mxu0 0
    %547 = vmatprep.subr.bf16.mxu0 0
    %548 = vmatpush1.bf16.msra.mxu0 0
    %549 = vmatprep.subr.bf16.mxu0 0
    %550 = vmatpush1.bf16.msra.mxu0 0
    %551 = vmatprep.subr.bf16.mxu0 0
    %552 = vmatpush1.bf16.msra.mxu0 0
    %553 = vmatprep.subr.bf16.mxu0 0
    %554 = vmatpush1.bf16.msra.mxu0 0
    %555 = vmatprep.subr.bf16.mxu0 %v400
    %556 = vmatpush1.bf16.msra.mxu0 %v399
    %557 = vmatprep.subr.bf16.mxu0 %v392
    %558 = vmatpush1.bf16.msra.mxu0 %v391
    %559 = vmatprep.subr.bf16.mxu0 0
    %560 = vmatpush2.bf16.msra.mxu0 0
    %561 = vmatprep.subr.bf16.mxu0 0
    %562 = vmatpush2.bf16.msra.mxu0 0
    %563 = vmatprep.subr.bf16.mxu0 0
    %564 = vmatpush2.bf16.msra.mxu0 0
    %565 = vmatprep.subr.bf16.mxu0 0
    %566 = vmatpush2.bf16.msra.mxu0 0
    %567 = vmatprep.subr.bf16.mxu0 0
    %568 = vmatpush2.bf16.msra.mxu0 0
    %569 = vmatprep.subr.bf16.mxu0 0
    %570 = vmatpush2.bf16.msra.mxu0 0
    %571 = vmatprep.subr.bf16.mxu0 0
    %572 = vmatpush2.bf16.msra.mxu0 0
    %573 = vmatprep.subr.bf16.mxu0 0
    %574 = vmatpush2.bf16.msra.mxu0 0
    %575 = vmatprep.mubr.bf16.mxu0 0
    %576 = vmatmul.mubr.bf16.gmra.mxu0 %v418
    %v577 = vpop.f32.mrf.mxu0
    %v578 = vadd.f32 %v318, %v577
    %v579 = vpop.f32.mrf.mxu0
    %v580 = vadd.f32 %v322, %v579
    %v581 = vpop.f32.mrf.mxu0
    %v582 = vpop.f32.mrf.mxu0
    %583 = vdwg.mxu0
    %vm584 = vcmp.ge.f32.partialorder %v455, 0.0
    %vm585 = vcmp.ge.f32.partialorder %v457, 0.0
    %vm586 = vcmp.ge.f32.partialorder %v496, 0.0
    %vm587 = vcmp.ge.f32.partialorder %v498, 0.0
    %vm588 = vcmp.ge.f32.partialorder %v537, 0.0
    %vm589 = vcmp.ge.f32.partialorder %v539, 0.0
    %vm590 = vcmp.ge.f32.partialorder %v578, 0.0
    %vm591 = vcmp.ge.f32.partialorder %v580, 0.0
    %v592 = vmul.f32 %v455, 0.01
    %v593 = vmul.f32 %v457, 0.01
    %v594 = vmul.f32 %v496, 0.01
    %v595 = vmul.f32 %v498, 0.01
    %v596 = vmul.f32 %v537, 0.01
    %v597 = vmul.f32 %v539, 0.01
    %v598 = vmul.f32 %v578, 0.01
    %v599 = vmul.f32 %v580, 0.01
    %v600 = vsel %vm584, %v455, %v592
    %v601 = vsel %vm585, %v457, %v593
    %v602 = vsel %vm586, %v496, %v594
    %v603 = vsel %vm587, %v498, %v595
    %v604 = vsel %vm588, %v537, %v596
    %v605 = vsel %vm589, %v539, %v597
    %v606 = vsel %vm590, %v578, %v598
    %v607 = vsel %vm591, %v580, %v599
    %v608 = vpack.c.bf16 %v600, %v600
    %v609 = vpack.c.bf16 %v601, %v601
    %v610 = vpack.c.bf16 %v602, %v602
    %v611 = vpack.c.bf16 %v603, %v603
    %v612 = vpack.c.bf16 %v604, %v604
    %v613 = vpack.c.bf16 %v605, %v605
    %v614 = vpack.c.bf16 %v606, %v606
    %v615 = vpack.c.bf16 %v607, %v607
    %v616 = vld [vmem:[#allocation10] sm:$0xf]
    %v617 = vld [vmem:[#allocation10 + $0x4] sm:$0xf]
    %v618 = vld [vmem:[#allocation10 + $0x8] sm:$0xf]
    %v619 = vld [vmem:[#allocation10 + $0xc] sm:$0xf]
    %v620 = vld [vmem:[#allocation10 + $0x10] sm:$0xf]
    %v621 = vld [vmem:[#allocation10 + $0x14] sm:$0xf]
    %v622 = vld [vmem:[#allocation10 + $0x18] sm:$0xf]
    %v623 = vld [vmem:[#allocation10 + $0x1c] sm:$0xf]
    %v624 = vld [vmem:[#allocation10 + $0x20] sm:$0xf]
    %v625 = vld [vmem:[#allocation10 + $0x24] sm:$0xf]
    %v626 = vld [vmem:[#allocation10 + $0x28] sm:$0xf]
    %v627 = vld [vmem:[#allocation10 + $0x2c] sm:$0xf]
    %v628 = vld [vmem:[#allocation10 + $0x30] sm:$0xf]
    %v629 = vld [vmem:[#allocation10 + $0x34] sm:$0xf]
    %v630 = vld [vmem:[#allocation10 + $0x38] sm:$0xf]
    %v631 = vld [vmem:[#allocation10 + $0x3c] sm:$0xf]
    %v632 = vld [vmem:[#allocation10 + $0x40] sm:$0xf]
    %v633 = vld [vmem:[#allocation10 + $0x44] sm:$0xf]
    %v634 = vld [vmem:[#allocation10 + $0x48] sm:$0xf]
    %v635 = vld [vmem:[#allocation10 + $0x4c] sm:$0xf]
    %v636 = vld [vmem:[#allocation10 + $0x50] sm:$0xf]
    %v637 = vld [vmem:[#allocation10 + $0x54] sm:$0xf]
    %v638 = vld [vmem:[#allocation10 + $0x58] sm:$0xf]
    %v639 = vld [vmem:[#allocation10 + $0x5c] sm:$0xf]
    %v640 = vld [vmem:[#allocation10 + $0x60] sm:$0xf]
    %v641 = vld [vmem:[#allocation10 + $0x64] sm:$0xf]
    %v642 = vld [vmem:[#allocation10 + $0x68] sm:$0xf]
    %v643 = vld [vmem:[#allocation10 + $0x6c] sm:$0xf]
    %v644 = vld [vmem:[#allocation10 + $0x70] sm:$0xf]
    %v645 = vld [vmem:[#allocation10 + $0x74] sm:$0xf]
    %v646 = vld [vmem:[#allocation10 + $0x78] sm:$0xf]
    %v647 = vld [vmem:[#allocation10 + $0x7c] sm:$0xf]
    %v648 = vld [vmem:[#allocation10 + $0x80] sm:$0xf]
    %v649 = vld [vmem:[#allocation10 + $0x84] sm:$0xf]
    %v650 = vld [vmem:[#allocation10 + $0x88] sm:$0xf]
    %v651 = vld [vmem:[#allocation10 + $0x8c] sm:$0xf]
    %v652 = vld [vmem:[#allocation10 + $0x90] sm:$0xf]
    %v653 = vld [vmem:[#allocation10 + $0x94] sm:$0xf]
    %v654 = vld [vmem:[#allocation10 + $0x98] sm:$0xf]
    %v655 = vld [vmem:[#allocation10 + $0x9c] sm:$0xf]
    %v656 = vld [vmem:[#allocation10 + $0xa0] sm:$0xf]
    %v657 = vld [vmem:[#allocation10 + $0xa4] sm:$0xf]
    %v658 = vld [vmem:[#allocation10 + $0xa8] sm:$0xf]
    %v659 = vld [vmem:[#allocation10 + $0xac] sm:$0xf]
    %v660 = vld [vmem:[#allocation10 + $0xb0] sm:$0xf]
    %v661 = vld [vmem:[#allocation10 + $0xb4] sm:$0xf]
    %v662 = vld [vmem:[#allocation10 + $0xb8] sm:$0xf]
    %v663 = vld [vmem:[#allocation10 + $0xbc] sm:$0xf]
    %v664 = vld [vmem:[#allocation10 + $0xc0] sm:$0xf]
    %v665 = vld [vmem:[#allocation10 + $0xc4] sm:$0xf]
    %v666 = vld [vmem:[#allocation10 + $0xc8] sm:$0xf]
    %v667 = vld [vmem:[#allocation10 + $0xcc] sm:$0xf]
    %v668 = vld [vmem:[#allocation10 + $0xd0] sm:$0xf]
    %v669 = vld [vmem:[#allocation10 + $0xd4] sm:$0xf]
    %v670 = vld [vmem:[#allocation10 + $0xd8] sm:$0xf]
    %v671 = vld [vmem:[#allocation10 + $0xdc] sm:$0xf]
    %v672 = vld [vmem:[#allocation10 + $0xe0] sm:$0xf]
    %v673 = vld [vmem:[#allocation10 + $0xe4] sm:$0xf]
    %v674 = vld [vmem:[#allocation10 + $0xe8] sm:$0xf]
    %v675 = vld [vmem:[#allocation10 + $0xec] sm:$0xf]
    %v676 = vld [vmem:[#allocation10 + $0xf0] sm:$0xf]
    %v677 = vld [vmem:[#allocation10 + $0xf4] sm:$0xf]
    %v678 = vld [vmem:[#allocation10 + $0xf8] sm:$0xf]
    %v679 = vld [vmem:[#allocation10 + $0xfc] sm:$0xf]
    %v680 = vld [vmem:[#allocation10 + $0x100] sm:$0xf]
    %v681 = vld [vmem:[#allocation10 + $0x104] sm:$0xf]
    %v682 = vld [vmem:[#allocation10 + $0x108] sm:$0xf]
    %v683 = vld [vmem:[#allocation10 + $0x10c] sm:$0xf]
    %v684 = vld [vmem:[#allocation10 + $0x110] sm:$0xf]
    %v685 = vld [vmem:[#allocation10 + $0x114] sm:$0xf]
    %v686 = vld [vmem:[#allocation10 + $0x118] sm:$0xf]
    %v687 = vld [vmem:[#allocation10 + $0x11c] sm:$0xf]
    %v688 = vld [vmem:[#allocation10 + $0x120] sm:$0xf]
    %v689 = vld [vmem:[#allocation10 + $0x124] sm:$0xf]
    %v690 = vld [vmem:[#allocation10 + $0x128] sm:$0xf]
    %v691 = vld [vmem:[#allocation10 + $0x12c] sm:$0xf]
    %v692 = vld [vmem:[#allocation10 + $0x130] sm:$0xf]
    %v693 = vld [vmem:[#allocation10 + $0x134] sm:$0xf]
    %v694 = vld [vmem:[#allocation10 + $0x138] sm:$0xf]
    %v695 = vld [vmem:[#allocation10 + $0x13c] sm:$0xf]
    %v696 = vld [vmem:[#allocation10 + $0x140] sm:$0xf]
    %v697 = vld [vmem:[#allocation10 + $0x144] sm:$0xf]
    %v698 = vld [vmem:[#allocation10 + $0x148] sm:$0xf]
    %v699 = vld [vmem:[#allocation10 + $0x14c] sm:$0xf]
    %v700 = vld [vmem:[#allocation10 + $0x150] sm:$0xf]
    %v701 = vld [vmem:[#allocation10 + $0x154] sm:$0xf]
    %v702 = vld [vmem:[#allocation10 + $0x158] sm:$0xf]
    %v703 = vld [vmem:[#allocation10 + $0x15c] sm:$0xf]
    %v704 = vld [vmem:[#allocation10 + $0x160] sm:$0xf]
    %v705 = vld [vmem:[#allocation10 + $0x164] sm:$0xf]
    %v706 = vld [vmem:[#allocation10 + $0x168] sm:$0xf]
    %v707 = vld [vmem:[#allocation10 + $0x16c] sm:$0xf]
    %v708 = vld [vmem:[#allocation10 + $0x170] sm:$0xf]
    %v709 = vld [vmem:[#allocation10 + $0x174] sm:$0xf]
    %v710 = vld [vmem:[#allocation10 + $0x178] sm:$0xf]
    %v711 = vld [vmem:[#allocation10 + $0x17c] sm:$0xf]
    %v712 = vld [vmem:[#allocation10 + $0x180] sm:$0xf]
    %v713 = vld [vmem:[#allocation10 + $0x184] sm:$0xf]
    %v714 = vld [vmem:[#allocation10 + $0x188] sm:$0xf]
    %v715 = vld [vmem:[#allocation10 + $0x18c] sm:$0xf]
    %v716 = vld [vmem:[#allocation10 + $0x190] sm:$0xf]
    %v717 = vld [vmem:[#allocation10 + $0x194] sm:$0xf]
    %v718 = vld [vmem:[#allocation10 + $0x198] sm:$0xf]
    %v719 = vld [vmem:[#allocation10 + $0x19c] sm:$0xf]
    %v720 = vld [vmem:[#allocation10 + $0x1a0] sm:$0xf]
    %v721 = vld [vmem:[#allocation10 + $0x1a4] sm:$0xf]
    %v722 = vld [vmem:[#allocation10 + $0x1a8] sm:$0xf]
    %v723 = vld [vmem:[#allocation10 + $0x1ac] sm:$0xf]
    %v724 = vld [vmem:[#allocation10 + $0x1b0] sm:$0xf]
    %v725 = vld [vmem:[#allocation10 + $0x1b4] sm:$0xf]
    %v726 = vld [vmem:[#allocation10 + $0x1b8] sm:$0xf]
    %v727 = vld [vmem:[#allocation10 + $0x1bc] sm:$0xf]
    %v728 = vld [vmem:[#allocation10 + $0x1c0] sm:$0xf]
    %v729 = vld [vmem:[#allocation10 + $0x1c4] sm:$0xf]
    %v730 = vld [vmem:[#allocation10 + $0x1c8] sm:$0xf]
    %v731 = vld [vmem:[#allocation10 + $0x1cc] sm:$0xf]
    %v732 = vld [vmem:[#allocation10 + $0x1d0] sm:$0xf]
    %v733 = vld [vmem:[#allocation10 + $0x1d4] sm:$0xf]
    %v734 = vld [vmem:[#allocation10 + $0x1d8] sm:$0xf]
    %v735 = vld [vmem:[#allocation10 + $0x1dc] sm:$0xf]
    %v736 = vld [vmem:[#allocation10 + $0x1e0] sm:$0xf]
    %v737 = vld [vmem:[#allocation10 + $0x1e4] sm:$0xf]
    %v738 = vld [vmem:[#allocation10 + $0x1e8] sm:$0xf]
    %v739 = vld [vmem:[#allocation10 + $0x1ec] sm:$0xf]
    %v740 = vld [vmem:[#allocation10 + $0x1f0] sm:$0xf]
    %v741 = vld [vmem:[#allocation10 + $0x1f4] sm:$0xf]
    %v742 = vld [vmem:[#allocation10 + $0x1f8] sm:$0xf]
    %v743 = vld [vmem:[#allocation10 + $0x1fc] sm:$0xf]
    %v744 = vld [vmem:[%s5] sm:$0x1]
    %v746 = vlaneseq
    %v747 = vshrl.u32 %v746, 7
    %v748 = vsub.s32 0, %v747
    %v749 = vrot.slane %v744, %v748
    %v879 = vunpack.c.l.b16 %v616
    %v880 = vunpack.c.l.b16 %v617
    %v881 = vunpack.c.l.b16 %v618
    %v882 = vunpack.c.l.b16 %v619
    %v883 = vunpack.c.l.b16 %v620
    %v884 = vunpack.c.l.b16 %v621
    %v885 = vunpack.c.l.b16 %v622
    %v886 = vunpack.c.l.b16 %v623
    %v887 = vunpack.c.l.b16 %v624
    %v888 = vunpack.c.l.b16 %v625
    %v889 = vunpack.c.l.b16 %v626
    %v890 = vunpack.c.l.b16 %v627
    %v891 = vunpack.c.l.b16 %v628
    %v892 = vunpack.c.l.b16 %v629
    %v893 = vunpack.c.l.b16 %v630
    %v894 = vunpack.c.l.b16 %v631
    %v895 = vunpack.c.l.b16 %v632
    %v896 = vunpack.c.l.b16 %v633
    %v897 = vunpack.c.l.b16 %v634
    %v898 = vunpack.c.l.b16 %v635
    %v899 = vunpack.c.l.b16 %v636
    %v900 = vunpack.c.l.b16 %v637
    %v901 = vunpack.c.l.b16 %v638
    %v902 = vunpack.c.l.b16 %v639
    %v903 = vunpack.c.l.b16 %v640
    %v904 = vunpack.c.l.b16 %v641
    %v905 = vunpack.c.l.b16 %v642
    %v906 = vunpack.c.l.b16 %v643
    %v907 = vunpack.c.l.b16 %v644
    %v908 = vunpack.c.l.b16 %v645
    %v909 = vunpack.c.l.b16 %v646
    %v910 = vunpack.c.l.b16 %v647
    %v911 = vunpack.c.l.b16 %v648
    %v912 = vunpack.c.l.b16 %v649
    %v913 = vunpack.c.l.b16 %v650
    %v914 = vunpack.c.l.b16 %v651
    %v915 = vunpack.c.l.b16 %v652
    %v916 = vunpack.c.l.b16 %v653
    %v917 = vunpack.c.l.b16 %v654
    %v918 = vunpack.c.l.b16 %v655
    %v919 = vunpack.c.l.b16 %v656
    %v920 = vunpack.c.l.b16 %v657
    %v921 = vunpack.c.l.b16 %v658
    %v922 = vunpack.c.l.b16 %v659
    %v923 = vunpack.c.l.b16 %v660
    %v924 = vunpack.c.l.b16 %v661
    %v925 = vunpack.c.l.b16 %v662
    %v926 = vunpack.c.l.b16 %v663
    %v927 = vunpack.c.l.b16 %v664
    %v928 = vunpack.c.l.b16 %v665
    %v929 = vunpack.c.l.b16 %v666
    %v930 = vunpack.c.l.b16 %v667
    %v931 = vunpack.c.l.b16 %v668
    %v932 = vunpack.c.l.b16 %v669
    %v933 = vunpack.c.l.b16 %v670
    %v934 = vunpack.c.l.b16 %v671
    %v935 = vunpack.c.l.b16 %v672
    %v936 = vunpack.c.l.b16 %v673
    %v937 = vunpack.c.l.b16 %v674
    %v938 = vunpack.c.l.b16 %v675
    %v939 = vunpack.c.l.b16 %v676
    %v940 = vunpack.c.l.b16 %v677
    %v941 = vunpack.c.l.b16 %v678
    %v942 = vunpack.c.l.b16 %v679
    %v943 = vunpack.c.l.b16 %v680
    %v944 = vunpack.c.l.b16 %v681
    %v945 = vunpack.c.l.b16 %v682
    %v946 = vunpack.c.l.b16 %v683
    %v947 = vunpack.c.l.b16 %v684
    %v948 = vunpack.c.l.b16 %v685
    %v949 = vunpack.c.l.b16 %v686
    %v950 = vunpack.c.l.b16 %v687
    %v951 = vunpack.c.l.b16 %v688
    %v952 = vunpack.c.l.b16 %v689
    %v953 = vunpack.c.l.b16 %v690
    %v954 = vunpack.c.l.b16 %v691
    %v955 = vunpack.c.l.b16 %v692
    %v956 = vunpack.c.l.b16 %v693
    %v957 = vunpack.c.l.b16 %v694
    %v958 = vunpack.c.l.b16 %v695
    %v959 = vunpack.c.l.b16 %v696
    %v960 = vunpack.c.l.b16 %v697
    %v961 = vunpack.c.l.b16 %v698
    %v962 = vunpack.c.l.b16 %v699
    %v963 = vunpack.c.l.b16 %v700
    %v964 = vunpack.c.l.b16 %v701
    %v965 = vunpack.c.l.b16 %v702
    %v966 = vunpack.c.l.b16 %v703
    %v967 = vunpack.c.l.b16 %v704
    %v968 = vunpack.c.l.b16 %v705
    %v969 = vunpack.c.l.b16 %v706
    %v970 = vunpack.c.l.b16 %v707
    %v971 = vunpack.c.l.b16 %v708
    %v972 = vunpack.c.l.b16 %v709
    %v973 = vunpack.c.l.b16 %v710
    %v974 = vunpack.c.l.b16 %v711
    %v975 = vunpack.c.l.b16 %v712
    %v976 = vunpack.c.l.b16 %v713
    %v977 = vunpack.c.l.b16 %v714
    %v978 = vunpack.c.l.b16 %v715
    %v979 = vunpack.c.l.b16 %v716
    %v980 = vunpack.c.l.b16 %v717
    %v981 = vunpack.c.l.b16 %v718
    %v982 = vunpack.c.l.b16 %v719
    %v983 = vunpack.c.l.b16 %v720
    %v984 = vunpack.c.l.b16 %v721
    %v985 = vunpack.c.l.b16 %v722
    %v986 = vunpack.c.l.b16 %v723
    %v987 = vunpack.c.l.b16 %v724
    %v988 = vunpack.c.l.b16 %v725
    %v989 = vunpack.c.l.b16 %v726
    %v990 = vunpack.c.l.b16 %v727
    %v991 = vunpack.c.l.b16 %v728
    %v992 = vunpack.c.l.b16 %v729
    %v993 = vunpack.c.l.b16 %v730
    %v994 = vunpack.c.l.b16 %v731
    %v995 = vunpack.c.l.b16 %v732
    %v996 = vunpack.c.l.b16 %v733
    %v997 = vunpack.c.l.b16 %v734
    %v998 = vunpack.c.l.b16 %v735
    %v999 = vunpack.c.l.b16 %v736
    %v1000 = vunpack.c.l.b16 %v737
    %v1001 = vunpack.c.l.b16 %v738
    %v1002 = vunpack.c.l.b16 %v739
    %v1003 = vunpack.c.l.b16 %v740
    %v1004 = vunpack.c.l.b16 %v741
    %v1005 = vunpack.c.l.b16 %v742
    %v1006 = vunpack.c.l.b16 %v743
    %v1007 = vpack.c.b16 %v880, %v879
    %v1008 = vpack.c.b16 %v882, %v881
    %v1009 = vpack.c.b16 %v884, %v883
    %v1010 = vpack.c.b16 %v886, %v885
    %v1011 = vpack.c.b16 %v888, %v887
    %v1012 = vpack.c.b16 %v890, %v889
    %v1013 = vpack.c.b16 %v892, %v891
    %v1014 = vpack.c.b16 %v894, %v893
    %v1015 = vpack.c.b16 %v896, %v895
    %v1016 = vpack.c.b16 %v898, %v897
    %v1017 = vpack.c.b16 %v900, %v899
    %v1018 = vpack.c.b16 %v902, %v901
    %v1019 = vpack.c.b16 %v904, %v903
    %v1020 = vpack.c.b16 %v906, %v905
    %v1021 = vpack.c.b16 %v908, %v907
    %v1022 = vpack.c.b16 %v910, %v909
    %v1023 = vpack.c.b16 %v912, %v911
    %v1024 = vpack.c.b16 %v914, %v913
    %v1025 = vpack.c.b16 %v916, %v915
    %v1026 = vpack.c.b16 %v918, %v917
    %v1027 = vpack.c.b16 %v920, %v919
    %v1028 = vpack.c.b16 %v922, %v921
    %v1029 = vpack.c.b16 %v924, %v923
    %v1030 = vpack.c.b16 %v926, %v925
    %v1031 = vpack.c.b16 %v928, %v927
    %v1032 = vpack.c.b16 %v930, %v929
    %v1033 = vpack.c.b16 %v932, %v931
    %v1034 = vpack.c.b16 %v934, %v933
    %v1035 = vpack.c.b16 %v936, %v935
    %v1036 = vpack.c.b16 %v938, %v937
    %v1037 = vpack.c.b16 %v940, %v939
    %v1038 = vpack.c.b16 %v942, %v941
    %v1039 = vpack.c.b16 %v944, %v943
    %v1040 = vpack.c.b16 %v946, %v945
    %v1041 = vpack.c.b16 %v948, %v947
    %v1042 = vpack.c.b16 %v950, %v949
    %v1043 = vpack.c.b16 %v952, %v951
    %v1044 = vpack.c.b16 %v954, %v953
    %v1045 = vpack.c.b16 %v956, %v955
    %v1046 = vpack.c.b16 %v958, %v957
    %v1047 = vpack.c.b16 %v960, %v959
    %v1048 = vpack.c.b16 %v962, %v961
    %v1049 = vpack.c.b16 %v964, %v963
    %v1050 = vpack.c.b16 %v966, %v965
    %v1051 = vpack.c.b16 %v968, %v967
    %v1052 = vpack.c.b16 %v970, %v969
    %v1053 = vpack.c.b16 %v972, %v971
    %v1054 = vpack.c.b16 %v974, %v973
    %v1055 = vpack.c.b16 %v976, %v975
    %v1056 = vpack.c.b16 %v978, %v977
    %v1057 = vpack.c.b16 %v980, %v979
    %v1058 = vpack.c.b16 %v982, %v981
    %v1059 = vpack.c.b16 %v984, %v983
    %v1060 = vpack.c.b16 %v986, %v985
    %v1061 = vpack.c.b16 %v988, %v987
    %v1062 = vpack.c.b16 %v990, %v989
    %v1063 = vpack.c.b16 %v992, %v991
    %v1064 = vpack.c.b16 %v994, %v993
    %v1065 = vpack.c.b16 %v996, %v995
    %v1066 = vpack.c.b16 %v998, %v997
    %v1067 = vpack.c.b16 %v1000, %v999
    %v1068 = vpack.c.b16 %v1002, %v1001
    %v1069 = vpack.c.b16 %v1004, %v1003
    %v1070 = vpack.c.b16 %v1006, %v1005
    %1135 = vmatprep.subr.bf16.mxu0 0
    %1136 = vmatpush1.bf16.msra.mxu0 %v1014
    %1137 = vmatprep.subr.bf16.mxu0 0
    %1138 = vmatpush1.bf16.msra.mxu0 %v1013
    %1139 = vmatprep.subr.bf16.mxu0 0
    %1140 = vmatpush1.bf16.msra.mxu0 %v1012
    %1141 = vmatprep.subr.bf16.mxu0 0
    %1142 = vmatpush1.bf16.msra.mxu0 %v1011
    %1143 = vmatprep.subr.bf16.mxu0 0
    %1144 = vmatpush1.bf16.msra.mxu0 %v1010
    %1145 = vmatprep.subr.bf16.mxu0 0
    %1146 = vmatpush1.bf16.msra.mxu0 %v1009
    %1147 = vmatprep.subr.bf16.mxu0 0
    %1148 = vmatpush1.bf16.msra.mxu0 %v1008
    %1149 = vmatprep.subr.bf16.mxu0 0
    %1150 = vmatpush1.bf16.msra.mxu0 %v1007
    %1151 = vmatprep.subr.bf16.mxu0 0
    %1152 = vmatpush2.bf16.msra.mxu0 %v1022
    %1153 = vmatprep.subr.bf16.mxu0 0
    %1154 = vmatpush2.bf16.msra.mxu0 %v1021
    %1155 = vmatprep.subr.bf16.mxu0 0
    %1156 = vmatpush2.bf16.msra.mxu0 %v1020
    %1157 = vmatprep.subr.bf16.mxu0 0
    %1158 = vmatpush2.bf16.msra.mxu0 %v1019
    %1159 = vmatprep.subr.bf16.mxu0 0
    %1160 = vmatpush2.bf16.msra.mxu0 %v1018
    %1161 = vmatprep.subr.bf16.mxu0 0
    %1162 = vmatpush2.bf16.msra.mxu0 %v1017
    %1163 = vmatprep.subr.bf16.mxu0 0
    %1164 = vmatpush2.bf16.msra.mxu0 %v1016
    %1165 = vmatprep.subr.bf16.mxu0 0
    %1166 = vmatpush2.bf16.msra.mxu0 %v1015
    %1167 = vmatprep.mubr.bf16.mxu0 %v609
    %1168 = vmatmul.mubr.bf16.gmra.mxu0 %v608
    %v1169 = vpop.f32.mrf.mxu0
    %v1170 = vadd.f32 %v749, %v1169
    %v1171 = vpop.f32.mrf.mxu0
    %v1172 = vpop.f32.mrf.mxu0
    %v1173 = vpop.f32.mrf.mxu0
    %1174 = vdwg.mxu0
    %1175 = vmatprep.subr.bf16.mxu0 0
    %1176 = vmatpush1.bf16.msra.mxu0 %v1030
    %1177 = vmatprep.subr.bf16.mxu0 0
    %1178 = vmatpush1.bf16.msra.mxu0 %v1029
    %1179 = vmatprep.subr.bf16.mxu0 0
    %1180 = vmatpush1.bf16.msra.mxu0 %v1028
    %1181 = vmatprep.subr.bf16.mxu0 0
    %1182 = vmatpush1.bf16.msra.mxu0 %v1027
    %1183 = vmatprep.subr.bf16.mxu0 0
    %1184 = vmatpush1.bf16.msra.mxu0 %v1026
    %1185 = vmatprep.subr.bf16.mxu0 0
    %1186 = vmatpush1.bf16.msra.mxu0 %v1025
    %1187 = vmatprep.subr.bf16.mxu0 0
    %1188 = vmatpush1.bf16.msra.mxu0 %v1024
    %1189 = vmatprep.subr.bf16.mxu0 0
    %1190 = vmatpush1.bf16.msra.mxu0 %v1023
    %1191 = vmatprep.subr.bf16.mxu0 0
    %1192 = vmatpush2.bf16.msra.mxu0 %v1038
    %1193 = vmatprep.subr.bf16.mxu0 0
    %1194 = vmatpush2.bf16.msra.mxu0 %v1037
    %1195 = vmatprep.subr.bf16.mxu0 0
    %1196 = vmatpush2.bf16.msra.mxu0 %v1036
    %1197 = vmatprep.subr.bf16.mxu0 0
    %1198 = vmatpush2.bf16.msra.mxu0 %v1035
    %1199 = vmatprep.subr.bf16.mxu0 0
    %1200 = vmatpush2.bf16.msra.mxu0 %v1034
    %1201 = vmatprep.subr.bf16.mxu0 0
    %1202 = vmatpush2.bf16.msra.mxu0 %v1033
    %1203 = vmatprep.subr.bf16.mxu0 0
    %1204 = vmatpush2.bf16.msra.mxu0 %v1032
    %1205 = vmatprep.subr.bf16.mxu0 0
    %1206 = vmatpush2.bf16.msra.mxu0 %v1031
    %1207 = vmatprep.mubr.bf16.mxu0 %v611
    %1208 = vmatmul.mubr.bf16.gmra.mxu0 %v610
    %v1209 = vpop.f32.mrf.mxu0
    %v1210 = vadd.f32 %v1170, %v1209
    %v1211 = vpop.f32.mrf.mxu0
    %v1212 = vpop.f32.mrf.mxu0
    %v1213 = vpop.f32.mrf.mxu0
    %1214 = vdwg.mxu0
    %1215 = vmatprep.subr.bf16.mxu0 0
    %1216 = vmatpush1.bf16.msra.mxu0 %v1046
    %1217 = vmatprep.subr.bf16.mxu0 0
    %1218 = vmatpush1.bf16.msra.mxu0 %v1045
    %1219 = vmatprep.subr.bf16.mxu0 0
    %1220 = vmatpush1.bf16.msra.mxu0 %v1044
    %1221 = vmatprep.subr.bf16.mxu0 0
    %1222 = vmatpush1.bf16.msra.mxu0 %v1043
    %1223 = vmatprep.subr.bf16.mxu0 0
    %1224 = vmatpush1.bf16.msra.mxu0 %v1042
    %1225 = vmatprep.subr.bf16.mxu0 0
    %1226 = vmatpush1.bf16.msra.mxu0 %v1041
    %1227 = vmatprep.subr.bf16.mxu0 0
    %1228 = vmatpush1.bf16.msra.mxu0 %v1040
    %1229 = vmatprep.subr.bf16.mxu0 0
    %1230 = vmatpush1.bf16.msra.mxu0 %v1039
    %1231 = vmatprep.subr.bf16.mxu0 0
    %1232 = vmatpush2.bf16.msra.mxu0 %v1054
    %1233 = vmatprep.subr.bf16.mxu0 0
    %1234 = vmatpush2.bf16.msra.mxu0 %v1053
    %1235 = vmatprep.subr.bf16.mxu0 0
    %1236 = vmatpush2.bf16.msra.mxu0 %v1052
    %1237 = vmatprep.subr.bf16.mxu0 0
    %1238 = vmatpush2.bf16.msra.mxu0 %v1051
    %1239 = vmatprep.subr.bf16.mxu0 0
    %1240 = vmatpush2.bf16.msra.mxu0 %v1050
    %1241 = vmatprep.subr.bf16.mxu0 0
    %1242 = vmatpush2.bf16.msra.mxu0 %v1049
    %1243 = vmatprep.subr.bf16.mxu0 0
    %1244 = vmatpush2.bf16.msra.mxu0 %v1048
    %1245 = vmatprep.subr.bf16.mxu0 0
    %1246 = vmatpush2.bf16.msra.mxu0 %v1047
    %1247 = vmatprep.mubr.bf16.mxu0 %v613
    %1248 = vmatmul.mubr.bf16.gmra.mxu0 %v612
    %v1249 = vpop.f32.mrf.mxu0
    %v1250 = vadd.f32 %v1210, %v1249
    %v1251 = vpop.f32.mrf.mxu0
    %v1252 = vpop.f32.mrf.mxu0
    %v1253 = vpop.f32.mrf.mxu0
    %1254 = vdwg.mxu0
    %1255 = vmatprep.subr.bf16.mxu0 0
    %1256 = vmatpush1.bf16.msra.mxu0 %v1062
    %1257 = vmatprep.subr.bf16.mxu0 0
    %1258 = vmatpush1.bf16.msra.mxu0 %v1061
    %1259 = vmatprep.subr.bf16.mxu0 0
    %1260 = vmatpush1.bf16.msra.mxu0 %v1060
    %1261 = vmatprep.subr.bf16.mxu0 0
    %1262 = vmatpush1.bf16.msra.mxu0 %v1059
    %1263 = vmatprep.subr.bf16.mxu0 0
    %1264 = vmatpush1.bf16.msra.mxu0 %v1058
    %1265 = vmatprep.subr.bf16.mxu0 0
    %1266 = vmatpush1.bf16.msra.mxu0 %v1057
    %1267 = vmatprep.subr.bf16.mxu0 0
    %1268 = vmatpush1.bf16.msra.mxu0 %v1056
    %1269 = vmatprep.subr.bf16.mxu0 0
    %1270 = vmatpush1.bf16.msra.mxu0 %v1055
    %1271 = vmatprep.subr.bf16.mxu0 0
    %1272 = vmatpush2.bf16.msra.mxu0 %v1070
    %1273 = vmatprep.subr.bf16.mxu0 0
    %1274 = vmatpush2.bf16.msra.mxu0 %v1069
    %1275 = vmatprep.subr.bf16.mxu0 0
    %1276 = vmatpush2.bf16.msra.mxu0 %v1068
    %1277 = vmatprep.subr.bf16.mxu0 0
    %1278 = vmatpush2.bf16.msra.mxu0 %v1067
    %1279 = vmatprep.subr.bf16.mxu0 0
    %1280 = vmatpush2.bf16.msra.mxu0 %v1066
    %1281 = vmatprep.subr.bf16.mxu0 0
    %1282 = vmatpush2.bf16.msra.mxu0 %v1065
    %1283 = vmatprep.subr.bf16.mxu0 0
    %1284 = vmatpush2.bf16.msra.mxu0 %v1064
    %1285 = vmatprep.subr.bf16.mxu0 0
    %1286 = vmatpush2.bf16.msra.mxu0 %v1063
    %1287 = vmatprep.mubr.bf16.mxu0 %v615
    %1288 = vmatmul.mubr.bf16.gmra.mxu0 %v614
    %v1289 = vpop.f32.mrf.mxu0
    %v1290 = vadd.f32 %v1250, %v1289
    %v1291 = vpop.f32.mrf.mxu0
    %v1292 = vpop.f32.mrf.mxu0
    %v1293 = vpop.f32.mrf.mxu0
    %1294 = vdwg.mxu0
    %1295 = vst [vmem:[#allocation11] sm:$0x3] %v1290
    // Predicated region
    $region46: #{tpu_custom_call.1} parent=1 // pred_check
      _
    $region47: #{tpu_custom_call.1} parent=1 // pred_check_branch
      %1297 = sbr.rel (0) target = $region49
    $region48: #{tpu_custom_call.1} parent=1 // pred_region
      %s1299 = ssub.s32 32, 32
      %1300 = vsyncadd [#allocation4], %s1299
      %s1302 = sshll.u32 [#allocation11], 4
      %s1303 = int_to_ptr.vmem [resolvable:$true] %s1302
      %1305 = dma.vmem_to_hbm [thread:$0]  %s1303, 32, %s6, [#allocation4]
    $region49: #{tpu_custom_call.1} parent=1 // pred_fallthru
      _
    // Predicated region
    $region50: #{tpu_custom_call.1} parent=1 // pred_check
      _
    $region51: #{tpu_custom_call.1} parent=1 // pred_check_branch
      %1307 = sbr.rel (0) target = $region53
    $region52: #{tpu_custom_call.1} parent=1 // pred_region
      %s1309 = ssub.s32 32, 32
      %1310 = vsyncadd [#allocation13], %s1309
      %s1312 = sshll.u32 [#allocation12], 4
      %s1313 = int_to_ptr.vmem [resolvable:$true] %s1312
      %1315 = dma.vmem_to_hbm [thread:$0]  %s1313, 32, %s7, [#allocation13]
    $region53: #{tpu_custom_call.1} parent=1 // pred_fallthru
      _
    // Predicated region
    $region54: #{tpu_custom_call.1} parent=1 // pred_check
      _
    $region55: #{tpu_custom_call.1} parent=1 // pred_check_branch
      %1317 = sbr.rel (0) target = $region57
    $region56: #{tpu_custom_call.1} parent=1 // pred_region
      %1318 = dma.done [#allocation4], 32
    $region57: #{tpu_custom_call.1} parent=1 // pred_fallthru
      _
    // Predicated region
    $region58: #{tpu_custom_call.1} parent=1 // pred_check
      _
    $region59: #{tpu_custom_call.1} parent=1 // pred_check_branch
      %1320 = sbr.rel (0) target = $region61
    $region60: #{tpu_custom_call.1} parent=1 // pred_region
      %1321 = dma.done [#allocation13], 32
    $region61: #{tpu_custom_call.1} parent=1 // pred_fallthru
      _
    %1322 = vsyncpa [#allocation3], 1
    %1323 = vsyncpa [#allocation6], 1
    %1324 = vsyncpa [#allocation9], 1
    %1325 = vsyncpa [#allocation4], 1
    %1326 = vsyncpa [#allocation13], 1

</llo_original>
